<compile_context>
chip_gen: v7x
topology: tpu7x:2x2x1
jax: 0.10.0
libtpu: 0.0.40
codegen_flags: <defaults>
</compile_context>

<pallas_src>
import jax
import jax.numpy as jnp
from jax import lax
from jax.experimental import pallas as pl
from jax.experimental.pallas import tpu as pltpu

_LANE = 128
_SUBLANE = 8


def _round_up(x, m):
    return (x + m - 1) // m * m


def _pick_slab_c(C, nb):
    """Largest C-slab whose two (nb, slab, 128) f32 carries stay register-resident."""
    cap = max(1, 128 // max(1, nb))          # nb * slab <= 128 sublanes per carry
    if C <= cap:
        return C
    divs = [d for d in range(1, cap + 1) if C % d == 0]
    mult8 = [d for d in divs if d % _SUBLANE == 0]
    return (mult8 or divs)[-1]


def _make_pool_kernel(hw_true, hw_blk, grid_hw, nb, C, slab_c):
    """Kernel computing per-(batch-row, channel) mean and max over HW."""
    n_chunks = hw_blk // _LANE
    last_valid = hw_true - (grid_hw - 1) * hw_blk      # valid lanes in last block
    n_full_last = last_valid // _LANE                  # fully-valid chunks in last block
    tail_rem = last_valid % _LANE                      # lanes in the partial chunk (0 = none)
    needs_tail = last_valid != hw_blk

    def kernel(x_ref, avg_ref, max_ref, sum_sc, max_sc):
        # x_ref   : (nb, C, hw_blk)   one spatial tile of nb batch rows
        # avg_ref : (nb, 1, C)        lane-dense pooled mean   (written at last k)
        # max_ref : (nb, 1, C)        lane-dense pooled max    (written at last k)
        # sum/max_sc : (nb, C, 128)   per-lane partials, persist across k
        k = pl.program_id(1)
        k_last = pl.num_programs(1) - 1

        @pl.when(k == 0)
        def _():
            sum_sc[...] = jnp.zeros(sum_sc.shape, sum_sc.dtype)
            max_sc[...] = jnp.full(max_sc.shape, -jnp.inf, max_sc.dtype)

        def accumulate(n_full, tail):
            # Running partials live in the fori_loop carry (vregs); scratch is
            # read-modify-written only once per C-slab per grid step.
            for c0 in range(0, C, slab_c):
                cs = slice(c0, c0 + slab_c)
                s0 = jnp.zeros((nb, slab_c, _LANE), jnp.float32)
                m0 = jnp.full((nb, slab_c, _LANE), -jnp.inf, jnp.float32)

                def body(c, carry):
                    s, m = carry
                    off = pl.multiple_of(c * _LANE, _LANE)
                    xc = x_ref[:, cs, pl.ds(off, _LANE)].astype(jnp.float32)
                    return s + xc, jnp.maximum(m, xc)

                if n_full > 0:
                    s0, m0 = lax.fori_loop(0, n_full, body, (s0, m0),
                                           unroll=min(8, n_full))
                if tail > 0:
                    # Single partially-valid chunk: static offset, static mask.
                    xc = x_ref[:, cs, pl.ds(n_full * _LANE, _LANE)].astype(jnp.float32)
                    lane = lax.broadcasted_iota(jnp.int32, (1, 1, _LANE), 2)
                    valid = lane < tail
                    s0 = s0 + jnp.where(valid, xc, 0.0)        # zero-pad fine for sum
                    m0 = jnp.maximum(m0, jnp.where(valid, xc, -jnp.inf))
                sum_sc[:, cs, :] += s0
                max_sc[:, cs, :] = jnp.maximum(max_sc[:, cs, :], m0)

        if not needs_tail:
            accumulate(n_chunks, 0)                    # every block fully valid
        elif grid_hw == 1:
            accumulate(n_full_last, tail_rem)          # single (partial) block
        else:
            @pl.when(k != k_last)
            def _():
                accumulate(n_chunks, 0)                # unmasked main body

            @pl.when(k == k_last)
            def _():
                accumulate(n_full_last, tail_rem)      # masked epilogue only

        @pl.when(k == k_last)
        def _():
            inv_hw = jnp.float32(1.0 / hw_true)
            s = jnp.sum(sum_sc[...], axis=-1) * inv_hw   # (nb, C): one small XLU reduce
            m = jnp.max(max_sc[...], axis=-1)            # (nb, C)
            avg_ref[...] = s[:, None, :].astype(avg_ref.dtype)
            max_ref[...] = m[:, None, :].astype(max_ref.dtype)

    return kernel


def channel_attention(x, w1, w2, *, block_bytes=None):
    """CBAM ChannelAttention forward.

    x : (N, C, H, W);  w1 : (C_mid, C);  w2 : (C, C_mid)  (1x1 conv weights, squeezed).
    Returns sigmoid(fc2(relu(fc1(avgpool(x)))) + fc2(relu(fc1(maxpool(x))))) as (N, C, 1, 1).
    """
    N, C, H, W = x.shape
    HW = H * W
    itemsize = jnp.dtype(x.dtype).itemsize

    # ---- block sizing from (queried) VMEM capacity ----
    try:
        vmem_cap = int(pltpu.get_tpu_info().vmem_capacity_bytes)
    except Exception:
        vmem_cap = 64 * 1024 * 1024                      # conservative (v7x)
    if block_bytes is None:
        # ~1/6 of VMEM per input block -> double-buffered input uses ~1/3.
        block_bytes = max(4 << 20, min(24 << 20, vmem_cap // 6))
    vmem_limit = int(min(vmem_cap - (4 << 20),
                         max(32 << 20, 2 * block_bytes + (16 << 20))))

    # ---- spatial tiling: big lane-aligned blocks, cdiv grid (no wrapper pad) ----
    hw_pad128 = _round_up(HW, _LANE)
    max_hw = max(_LANE, (block_bytes // max(1, C * itemsize)) // _LANE * _LANE)
    hw_blk = min(hw_pad128, max_hw)
    grid_hw = pl.cdiv(HW, hw_blk)

    # ---- batch tiling: cdiv grid; out-of-range tail rows are discarded on writeback.
    nb_cap = max(1, block_bytes // max(1, C * hw_blk * itemsize))
    nb = min(N, nb_cap)
    nb = min(nb, max(1, (2 << 20) // (C * _LANE * 8)))   # keep f32 scratch <= ~4 MiB
    if N >= 2:
        nb = min(nb, pl.cdiv(N, 2))   # keep >= 2 "parallel" grid steps (v7x: 2 TCs)
    grid_n = pl.cdiv(N, nb)
    # TODO(synk): for N == 1 on v7x, additionally split HW into an independent
    # "parallel" partial-reduction grid dim (per-core (nb, C) partials combined in
    # the wrapper) so the second TensorCore is not idle.

    slab_c = _pick_slab_c(C, nb)
    x_flat = x.reshape(N, C, HW)
    kernel = _make_pool_kernel(HW, hw_blk, grid_hw, nb, C, slab_c)

    avg, mx = pl.pallas_call(
        kernel,
        out_shape=(
            jax.ShapeDtypeStruct((N, 1, C), jnp.float32),
            jax.ShapeDtypeStruct((N, 1, C), jnp.float32),
        ),
        grid_spec=pltpu.PrefetchScalarGridSpec(
            num_scalar_prefetch=0,
            grid=(grid_n, grid_hw),
            in_specs=[
                pl.BlockSpec((nb, C, hw_blk), lambda n, k: (n, 0, k)),
            ],
            out_specs=[
                pl.BlockSpec((nb, 1, C), lambda n, k: (n, 0, 0)),
                pl.BlockSpec((nb, 1, C), lambda n, k: (n, 0, 0)),
            ],
            scratch_shapes=[
                pltpu.VMEM((nb, C, _LANE), jnp.float32),   # running sum partials
                pltpu.VMEM((nb, C, _LANE), jnp.float32),   # running max partials
            ],
        ),
        compiler_params=pltpu.CompilerParams(
            dimension_semantics=("parallel", "arbitrary"),
            vmem_limit_bytes=vmem_limit,
        ),
    )(x_flat)

    avg = avg[:, 0, :]   # (N, C)
    mx = mx[:, 0, :]     # (N, C)

    # Tiny shared channel MLP (1x1 convs) + sigmoid: a few FLOPs per channel,
    # done as plain JAX (avoids 1-column MXU matmuls inside the kernel).
    w1f = w1.astype(jnp.float32)
    w2f = w2.astype(jnp.float32)

    def mlp(v):                                   # v: (N, C)
        h = jnp.maximum(v @ w1f.T, 0.0)           # (N, C_mid)
        return h @ w2f.T                          # (N, C)

    att = jax.nn.sigmoid(mlp(avg) + mlp(mx))      # (N, C)
    return att[:, :, None, None].astype(x.dtype)  # (N, C, 1, 1)


def _reference(x, w1, w2):
    # Pure-JAX reference for a sanity check.
    avg = jnp.mean(x, axis=(2, 3))                # (N, C)
    mx = jnp.max(x, axis=(2, 3))                  # (N, C)

    def mlp(v):
        h = jnp.maximum(v @ w1.T, 0.0)
        return h @ w2.T

    return jax.nn.sigmoid(mlp(avg) + mlp(mx))[:, :, None, None]


if __name__ == "__main__":
    key = jax.random.PRNGKey(0)

    # 1) module defaults (in_planes=32, ratio=16); HW multiple of 128, grid_n=2, unmasked.
    # 2) masked spatial tail (HW=100 -> one partial 128-lane chunk) + cdiv batch tail (N=3, nb=2).
    # 3) small explicit block_bytes -> multi-step spatial grid with a masked last
    #    block (exercises both unmasked main-body and masked epilogue paths).
    configs = [
        (2, 32, 16, 16, 16, None),
        (3, 16, 10, 10, 16, None),
        (2, 8, 20, 20, 4, 8 * 1024),
    ]
    for (N, C, H, W, ratio, bb) in configs:
        C_mid = max(1, C // ratio)
        key, kx, k1, k2 = jax.random.split(key, 4)

        x = jax.random.normal(kx, (N, C, H, W), dtype=jnp.float32)
        # Conv2d(out, in, 1, 1) weights squeezed to 2D.
        w1 = jax.random.normal(k1, (C_mid, C), dtype=jnp.float32) * 0.1
        w2 = jax.random.normal(k2, (C, C_mid), dtype=jnp.float32) * 0.1

        out = jax.block_until_ready(channel_attention(x, w1, w2, block_bytes=bb))
        ref = _reference(x, w1, w2)
        assert out.shape == (N, C, 1, 1)
        assert jnp.allclose(out, ref, atol=1e-5, rtol=1e-5), f"mismatch for {(N, C, H, W)}"

    print("KERNEL_OK")
</pallas_src>

<mosaic_0001>
module attributes {stable_mosaic.version = 11 : i64} {
  func.func @kernel(%arg0: i32, %arg1: i32, %arg2: memref<1x32x256xf32, #tpu.memory_space<vmem>>, %arg3: memref<1x1x32xf32, #tpu.memory_space<vmem>>, %arg4: memref<1x1x32xf32, #tpu.memory_space<vmem>>, %arg5: memref<1x32x128xf32, #tpu.memory_space<vmem>>, %arg6: memref<1x32x128xf32, #tpu.memory_space<vmem>>) attributes {dimension_semantics = [#tpu.dimension_semantics<parallel>, #tpu.dimension_semantics<arbitrary>], iteration_bounds = array<i64: 2, 1>, scalar_prefetch = 0 : i64, scratch_operands = 2 : i64, tpu.core_type = #tpu.core_type<tc>, window_params = [{transform_indices = @transform_0, window_bounds = array<i64: 1, 32, 256>}, {transform_indices = @transform_1, window_bounds = array<i64: 1, 1, 32>}, {transform_indices = @transform_2, window_bounds = array<i64: 1, 1, 32>}]} {
    %c0_i32 = arith.constant 0 : i32
    %0 = arith.cmpi eq, %arg1, %c0_i32 : i32
    %1 = arith.extui %0 : i1 to i32
    %c0_i32_0 = arith.constant 0 : i32
    %2 = arith.cmpi ne, %1, %c0_i32_0 : i32
    scf.if %2 {
      %cst_21 = arith.constant 0.000000e+00 : f32
      %26 = vector.broadcast %cst_21 : f32 to vector<1x32x128xf32>
      %c0_22 = arith.constant 0 : index
      %c0_23 = arith.constant 0 : index
      %c0_24 = arith.constant 0 : index
      %27 = vector.load %arg5[%c0_22, %c0_23, %c0_24] : memref<1x32x128xf32, #tpu.memory_space<vmem>>, vector<1x32x128xf32>
      tpu.vector_store %arg5[%c0_22, %c0_23, %c0_24], %26 {strides = array<i32>} : memref<1x32x128xf32, #tpu.memory_space<vmem>>, vector<1x32x128xf32>,
      %cst_25 = arith.constant 0xFF800000 : f32
      %28 = vector.broadcast %cst_25 : f32 to vector<1x32x128xf32>
      %c0_26 = arith.constant 0 : index
      %c0_27 = arith.constant 0 : index
      %c0_28 = arith.constant 0 : index
      %29 = vector.load %arg6[%c0_26, %c0_27, %c0_28] : memref<1x32x128xf32, #tpu.memory_space<vmem>>, vector<1x32x128xf32>
      tpu.vector_store %arg6[%c0_26, %c0_27, %c0_28], %28 {strides = array<i32>} : memref<1x32x128xf32, #tpu.memory_space<vmem>>, vector<1x32x128xf32>,
    } else {
    }
    %cst = arith.constant 0.000000e+00 : f32
    %3 = vector.broadcast %cst : f32 to vector<1x32x128xf32>
    %cst_1 = arith.constant 0xFF800000 : f32
    %4 = vector.broadcast %cst_1 : f32 to vector<1x32x128xf32>
    %c0_i32_2 = arith.constant 0 : i32
    %c128_i32 = arith.constant 128 : i32
    %5 = arith.muli %c0_i32_2, %c128_i32 : i32
    %6 = tpu.assume_multiple %5, 128 : i32
    %c0 = arith.constant 0 : index
    %c0_3 = arith.constant 0 : index
    %7 = arith.index_cast %6 : i32 to index
    %8 = vector.load %arg2[%c0, %c0_3, %7] : memref<1x32x256xf32, #tpu.memory_space<vmem>>, vector<1x32x128xf32>
    %9 = arith.addf %3, %8 : vector<1x32x128xf32>
    %10 = arith.maximumf %4, %8 : vector<1x32x128xf32>
    %c1_i32 = arith.constant 1 : i32
    %c128_i32_4 = arith.constant 128 : i32
    %11 = arith.muli %c1_i32, %c128_i32_4 : i32
    %12 = tpu.assume_multiple %11, 128 : i32
    %c0_5 = arith.constant 0 : index
    %c0_6 = arith.constant 0 : index
    %13 = arith.index_cast %12 : i32 to index
    %14 = vector.load %arg2[%c0_5, %c0_6, %13] : memref<1x32x256xf32, #tpu.memory_space<vmem>>, vector<1x32x128xf32>
    %15 = arith.addf %9, %14 : vector<1x32x128xf32>
    %16 = arith.maximumf %10, %14 : vector<1x32x128xf32>
    %c2_i32 = arith.constant 2 : i32
    %c0_7 = arith.constant 0 : index
    %c0_8 = arith.constant 0 : index
    %c0_9 = arith.constant 0 : index
    %17 = vector.load %arg5[%c0_7, %c0_8, %c0_9] : memref<1x32x128xf32, #tpu.memory_space<vmem>>, vector<1x32x128xf32>
    %18 = arith.addf %17, %15 : vector<1x32x128xf32>
    %c0_10 = arith.constant 0 : index
    %c0_11 = arith.constant 0 : index
    %c0_12 = arith.constant 0 : index
    %19 = vector.load %arg5[%c0_10, %c0_11, %c0_12] : memref<1x32x128xf32, #tpu.memory_space<vmem>>, vector<1x32x128xf32>
    tpu.vector_store %arg5[%c0_10, %c0_11, %c0_12], %18 {strides = array<i32>} : memref<1x32x128xf32, #tpu.memory_space<vmem>>, vector<1x32x128xf32>,
    %c0_13 = arith.constant 0 : index
    %c0_14 = arith.constant 0 : index
    %c0_15 = arith.constant 0 : index
    %20 = vector.load %arg6[%c0_13, %c0_14, %c0_15] : memref<1x32x128xf32, #tpu.memory_space<vmem>>, vector<1x32x128xf32>
    %21 = arith.maximumf %20, %16 : vector<1x32x128xf32>
    %c0_16 = arith.constant 0 : index
    %c0_17 = arith.constant 0 : index
    %c0_18 = arith.constant 0 : index
    %22 = vector.load %arg6[%c0_16, %c0_17, %c0_18] : memref<1x32x128xf32, #tpu.memory_space<vmem>>, vector<1x32x128xf32>
    tpu.vector_store %arg6[%c0_16, %c0_17, %c0_18], %21 {strides = array<i32>} : memref<1x32x128xf32, #tpu.memory_space<vmem>>, vector<1x32x128xf32>,
    %c0_i32_19 = arith.constant 0 : i32
    %23 = arith.cmpi eq, %arg1, %c0_i32_19 : i32
    %24 = arith.extui %23 : i1 to i32
    %c0_i32_20 = arith.constant 0 : i32
    %25 = arith.cmpi ne, %24, %c0_i32_20 : i32
    scf.if %25 {
      %c0_21 = arith.constant 0 : index
      %c0_22 = arith.constant 0 : index
      %c0_23 = arith.constant 0 : index
      %26 = vector.load %arg5[%c0_21, %c0_22, %c0_23] : memref<1x32x128xf32, #tpu.memory_space<vmem>>, vector<1x32x128xf32>
      %cst_24 = arith.constant dense<0.000000e+00> : vector<1x32xf32>
      %27 = vector.multi_reduction <add>, %26, %cst_24 [2] : vector<1x32x128xf32> to vector<1x32xf32>
      %cst_25 = arith.constant 3.906250e-03 : f32
      %28 = vector.broadcast %cst_25 : f32 to vector<1x32xf32>
      %29 = arith.mulf %27, %28 : vector<1x32xf32>
      %c0_26 = arith.constant 0 : index
      %c0_27 = arith.constant 0 : index
      %c0_28 = arith.constant 0 : index
      %30 = vector.load %arg6[%c0_26, %c0_27, %c0_28] : memref<1x32x128xf32, #tpu.memory_space<vmem>>, vector<1x32x128xf32>
      %cst_29 = arith.constant dense<0xFF800000> : vector<1x32xf32>
      %31 = vector.multi_reduction <maximumf>, %30, %cst_29 [2] : vector<1x32x128xf32> to vector<1x32xf32>
      %32 = vector.shape_cast %29 : vector<1x32xf32> to vector<1x1x32xf32>
      %c0_30 = arith.constant 0 : index
      %c0_31 = arith.constant 0 : index
      %c0_32 = arith.constant 0 : index
      %33 = vector.load %arg3[%c0_30, %c0_31, %c0_32] : memref<1x1x32xf32, #tpu.memory_space<vmem>>, vector<1x1x32xf32>
      tpu.vector_store %arg3[%c0_30, %c0_31, %c0_32], %32 {strides = array<i32>} : memref<1x1x32xf32, #tpu.memory_space<vmem>>, vector<1x1x32xf32>,
      %34 = vector.shape_cast %31 : vector<1x32xf32> to vector<1x1x32xf32>
      %c0_33 = arith.constant 0 : index
      %c0_34 = arith.constant 0 : index
      %c0_35 = arith.constant 0 : index
      %35 = vector.load %arg4[%c0_33, %c0_34, %c0_35] : memref<1x1x32xf32, #tpu.memory_space<vmem>>, vector<1x1x32xf32>
      tpu.vector_store %arg4[%c0_33, %c0_34, %c0_35], %34 {strides = array<i32>} : memref<1x1x32xf32, #tpu.memory_space<vmem>>, vector<1x1x32xf32>,
    } else {
    }
    return
  }
  func.func @transform_0(%arg0: i32, %arg1: i32) -> (i32, i32, i32) {
    %c0_i32 = arith.constant 0 : i32
    %c0_i32_0 = arith.constant 0 : i32
    return %arg0, %c0_i32, %arg1 : i32, i32, i32
  }
  func.func @transform_1(%arg0: i32, %arg1: i32) -> (i32, i32, i32) {
    %c0_i32 = arith.constant 0 : i32
    %c0_i32_0 = arith.constant 0 : i32
    %c0_i32_1 = arith.constant 0 : i32
    return %arg0, %c0_i32, %c0_i32_0 : i32, i32, i32
  }
  func.func @transform_2(%arg0: i32, %arg1: i32) -> (i32, i32, i32) {
    %c0_i32 = arith.constant 0 : i32
    %c0_i32_0 = arith.constant 0 : i32
    %c0_i32_1 = arith.constant 0 : i32
    return %arg0, %c0_i32, %c0_i32_0 : i32, i32, i32
  }
}

</mosaic_0001>

<llo_original>
// kernel: tpu_custom_call.1
$region0: #{tpu_custom_call.1}
  #allocation0 [shape = 'u32[]', space=smem, size = 0x4, offset = 0x4, fixed_abs, tag = 'smem constant byte address 0x4 - core index']
  #allocation1 [shape = 'u32[144,128]{1,0:T(1,128)}', space=vmem, size = 0x12000, scoped, tag = 'internal scratch']
  #allocation2 [shape = 'f32[1,32,128]{2,1,0:T(8,128)}', space=vmem, size = 0x4000, scoped, tag = 'scratch operand']
  #allocation3 [shape = 'f32[1,32,128]{2,1,0:T(8,128)}', space=vmem, size = 0x4000, scoped, tag = 'scratch operand']
  %s0 = inlined_call_operand.hbm [shape: f32[2,32,256], index: 0, kind: input, shape index: {}]
  %s1 = inlined_call_operand.hbm [shape: f32[2,1,32], index: 1, kind: output, shape index: {0}]
  %s2 = inlined_call_operand.hbm [shape: f32[2,1,32], index: 2, kind: output, shape index: {1}]
  %3 = xla_tuple %s1, %s2
  %s4 = sld [smem:[#allocation0]]
  $region57: #{tpu_custom_call.1} parent=0
    _
  %s6 = ssub.s32 1, %s4
  %s7 = scalar_select 0, %s6, %s4
  $region1: #{tpu_custom_call.1} parent=0
    #allocation4 [shape = 'u8[65536]{0}', space=vmem, size = 0x10000, scoped, tag = 'input window, operand 0']
    #allocation5 [shape = 's32[2]{0}', space=sflag, size = 0x8, scoped, tag = 'scoped memory for tpu_custom_call.1']
    #allocation6 [shape = 's32[2]{0}', space=sflag, size = 0x8, scoped, tag = 'scoped memory for tpu_custom_call.1']
    #allocation7 [shape = 'u8[1024]{0}', space=vmem, size = 0x400, scoped, tag = 'output window, operand 0']
    #allocation8 [shape = 'u8[1024]{0}', space=vmem, size = 0x400, scoped, tag = 'output window, operand 1']
    #allocation9 [shape = 's32[2]{0}', space=sflag, size = 0x8, scoped, tag = 'scoped memory for tpu_custom_call.1']
    %8 = vsyncpa [#allocation5], 0
    %s9 = scalar_lea.sflag [#allocation5], 1
    %10 = vsyncpa %s9, 0
    %11 = vsyncpa [#allocation6], 0
    %s12 = scalar_lea.sflag [#allocation6], 1
    %13 = vsyncpa %s12, 0
    %14 = vsyncpa [#allocation9], 0
    %s15 = scalar_lea.sflag [#allocation9], 1
    %16 = vsyncpa %s15, 0
    loop: start=0, step=1, limit=4
    $region2: #{tpu_custom_call.1} parent=1 // loop_pre_header
      _
    $region3: #{tpu_custom_call.1} parent=1 // loop_header
      %s18 = sphi 0, %s22
      %p19 = scmp.ge.s32.totalorder %s18, 4
      %s25 = sphi 0, %s37
      %s26 = sphi 0, %s33
      %s27 = sphi 0, %s25
      %s28 = sphi 0, %s26
      %s29 = sphi 0, %s27
      %s30 = sphi 0, %s28
      %s42 = sphi 0, %s44
      %s45 = sphi 0, %s42
      %s46 = sphi 0, %s45
      %s62 = sphi 0, %s46
      %s68 = sphi 0, %s70
      %s71 = sphi 0, %s68
      %s72 = sphi 0, %s71
      %s88 = sphi 0, %s72
      %s94 = sphi 0, %s96
      %s97 = sphi 0, %s94
      %s98 = sphi 0, %s97
      %s114 = sphi 0, %s98
    $region4: #{tpu_custom_call.1} parent=1 // loop_header_branch
      %21 = sbr.rel (%p19) target = $region8
    $region5: #{tpu_custom_call.1} parent=1 // loop_body
      %s23 = ssub.s32 %s18, 1
      %s24 = ssub.s32 %s18, 2
      %s31 = sadd.s32 1, %s26
      %p32 = scmp.ge.s32.totalorder %s31, 1
      %s33 = scalar_select %p32, 0, %s31
      %s34 = sadd.s32 1, %s25
      %s35 = scalar_select %p32, %s34, %s25
      %p36 = scmp.ge.s32.totalorder %s35, 2
      %s37 = scalar_select %p36, 0, %s35
      %s38 = ssub.s32 %s25, %s37
      %s39 = ssub.s32 %s26, %s33
      %s40 = sor.u32 %s38, %s39
      %p41 = scmp.eq.s32.totalorder %s40, 0
      %s43 = sadd.s32 %s42, 1
      %s44 = scalar_select %p41, %s42, %s43
      %p47 = pneg %p41
      %p48 = scmp.eq.s32.totalorder %s18, 1
      %p49 = por %p47, %p48
      %p50 = scmp.ne.s32.totalorder %s42, %s45
      %p51 = scmp.eq.s32.totalorder %s18, 0
      %p52 = por %p50, %p51
      %p53 = scmp.ne.s32.totalorder %s42, %s45
      %p54 = scmp.eq.s32.totalorder %s23, 1
      %p55 = por %p53, %p54
      %p56 = scmp.ne.s32.totalorder %s45, %s46
      %p57 = scmp.eq.s32.totalorder %s23, 0
      %p58 = por %p56, %p57
      %p59 = scmp.ne.s32.totalorder %s45, %s46
      %p60 = scmp.eq.s32.totalorder %s24, 1
      %p61 = por %p59, %p60
      %p63 = scmp.ne.s32.totalorder %s46, %s62
      %p64 = scmp.eq.s32.totalorder %s24, 0
      %p65 = por %p63, %p64
      %s66 = ssub.s32 %s25, %s37
      %p67 = scmp.eq.s32.totalorder %s66, 0
      %s69 = sadd.s32 %s68, 1
      %s70 = scalar_select %p67, %s68, %s69
      %p73 = pneg %p67
      %p74 = scmp.eq.s32.totalorder %s18, 1
      %p75 = por %p73, %p74
      %p76 = scmp.ne.s32.totalorder %s68, %s71
      %p77 = scmp.eq.s32.totalorder %s18, 0
      %p78 = por %p76, %p77
      %p79 = scmp.ne.s32.totalorder %s68, %s71
      %p80 = scmp.eq.s32.totalorder %s23, 1
      %p81 = por %p79, %p80
      %p82 = scmp.ne.s32.totalorder %s71, %s72
      %p83 = scmp.eq.s32.totalorder %s23, 0
      %p84 = por %p82, %p83
      %p85 = scmp.ne.s32.totalorder %s71, %s72
      %p86 = scmp.eq.s32.totalorder %s24, 1
      %p87 = por %p85, %p86
      %p89 = scmp.ne.s32.totalorder %s72, %s88
      %p90 = scmp.eq.s32.totalorder %s24, 0
      %p91 = por %p89, %p90
      %s92 = ssub.s32 %s25, %s37
      %p93 = scmp.eq.s32.totalorder %s92, 0
      %s95 = sadd.s32 %s94, 1
      %s96 = scalar_select %p93, %s94, %s95
      %p99 = pneg %p93
      %p100 = scmp.eq.s32.totalorder %s18, 1
      %p101 = por %p99, %p100
      %p102 = scmp.ne.s32.totalorder %s94, %s97
      %p103 = scmp.eq.s32.totalorder %s18, 0
      %p104 = por %p102, %p103
      %p105 = scmp.ne.s32.totalorder %s94, %s97
      %p106 = scmp.eq.s32.totalorder %s23, 1
      %p107 = por %p105, %p106
      %p108 = scmp.ne.s32.totalorder %s97, %s98
      %p109 = scmp.eq.s32.totalorder %s23, 0
      %p110 = por %p108, %p109
      %p111 = scmp.ne.s32.totalorder %s97, %s98
      %p112 = scmp.eq.s32.totalorder %s24, 1
      %p113 = por %p111, %p112
      %p115 = scmp.ne.s32.totalorder %s98, %s114
      %p116 = scmp.eq.s32.totalorder %s24, 0
      %p117 = por %p115, %p116
      %p118 = scmp.le.s32.totalorder 1, %s18
      %p119 = scmp.lt.s32.totalorder %s18, 3
      %p120 = pnand %p118, %p119
      %p121 = pneg %p120
      // Predicated region
      $region9: #{tpu_custom_call.1} parent=5 // pred_check
        _
      $region10: #{tpu_custom_call.1} parent=5 // pred_check_branch
        %123 = sbr.rel (%p120) target = $region12
      $region11: #{tpu_custom_call.1} parent=5 // pred_region
        %s124 = ssub.s32 %s18, 1
      $region12: #{tpu_custom_call.1} parent=5 // pred_fallthru
        _
      %p125 = scmp.lt.s32.totalorder %s18, 2
      // Predicated region
      $region13: #{tpu_custom_call.1} parent=5 // pred_check
        %p126 = pneg %p125
      $region14: #{tpu_custom_call.1} parent=5 // pred_check_branch
        %128 = sbr.rel (%p126) target = $region16
      $region15: #{tpu_custom_call.1} parent=5 // pred_region
        // Predicated region
        $region17: #{tpu_custom_call.1} parent=15 // pred_check
          %p129 = pneg %p52
        $region18: #{tpu_custom_call.1} parent=15 // pred_check_branch
          %131 = sbr.rel (%p129) target = $region20
        $region19: #{tpu_custom_call.1} parent=15 // pred_region
          %s132 = sand.u32 %s42, 1
          %s133 = scalar_lea.sflag [#allocation5], %s132
          %s134 = sand.u32 %s42, 1
          %s135 = smul.addr %s134, 64
          %s136 = scalar_lea.vmem [#allocation4], %s135
          %s137 = smul.u32 2, %s26
          %s139 = ssub.s32 1024, 1024
          %140 = vsyncadd %s133, %s139
          %s141 = smul.addr %s25, 8
          %s142 = sadd.s32 %s137, %s141
          %s143 = smul.addr %s142, 128
          %s144 = scalar_lea.hbm %s0, %s143
          %s145 = sshll.u32 %s136, 4
          %s146 = int_to_ptr.vmem [resolvable:$true] %s145
          %151 = dma.hbm_to_vmem [thread:$0]  %s144, 1024, %s146, %s133, 256, 256, 16
        $region20: #{tpu_custom_call.1} parent=15 // pred_fallthru
          _
      $region16: #{tpu_custom_call.1} parent=5 // pred_fallthru
        _
      %p152 = scmp.le.s32.totalorder 1, %s18
      %p153 = scmp.lt.s32.totalorder %s18, 3
      %p154 = pnand %p152, %p153
      %p155 = pneg %p154
      // Predicated region
      $region21: #{tpu_custom_call.1} parent=5 // pred_check
        _
      $region22: #{tpu_custom_call.1} parent=5 // pred_check_branch
        %157 = sbr.rel (%p154) target = $region24
      $region23: #{tpu_custom_call.1} parent=5 // pred_region
        %s158 = ssub.s32 %s18, 1
        %s159 = sand.u32 %s45, 1
        %s160 = scalar_lea.sflag [#allocation5], %s159
        %s161 = sand.u32 %s45, 1
        %s162 = smul.addr %s161, 64
        %s163 = scalar_lea.vmem [#allocation4], %s162
        // Predicated region
        $region25: #{tpu_custom_call.1} parent=23 // pred_check
          %p164 = pneg %p58
        $region26: #{tpu_custom_call.1} parent=23 // pred_check_branch
          %166 = sbr.rel (%p164) target = $region28
        $region27: #{tpu_custom_call.1} parent=23 // pred_region
          %167 = dma.done %s160, 1024
        $region28: #{tpu_custom_call.1} parent=23 // pred_fallthru
          _
        %s168 = sand.u32 %s45, 1
        %s169 = scalar_lea.sflag [#allocation5], %s168
        %s170 = sand.u32 %s45, 1
        %s171 = smul.addr %s170, 64
        %s172 = scalar_lea.vmem [#allocation4], %s171
        %p173 = pneg %p58
        %p174 = pneg %p55
        %p175 = pneg %p84
        %p176 = pneg %p81
        %s177 = sand.u32 %s71, 1
        %s178 = scalar_lea.sflag [#allocation6], %s177
        %s179 = sand.u32 %s71, 1
        %s180 = scalar_lea.vmem [#allocation7], %s179
        %p181 = pneg %p110
        %p182 = pneg %p107
        %s183 = sand.u32 %s97, 1
        %s184 = scalar_lea.sflag [#allocation9], %s183
        %s185 = sand.u32 %s97, 1
        %s186 = scalar_lea.vmem [#allocation8], %s185
        %s187 = smul.u32 2, %s28
        %p188 = scmp.eq.s32.totalorder %s28, 0
        // Predicated region
        $region29: #{tpu_custom_call.1} parent=23 // pred_check
          %p189 = pneg %p188
        $region30: #{tpu_custom_call.1} parent=23 // pred_check_branch
          %191 = sbr.rel (%p189) target = $region32
        $region31: #{tpu_custom_call.1} parent=23 // pred_region
          %192 = vst [vmem:[#allocation2] sm:$0xff] 0.0
          %193 = vst [vmem:[#allocation2 + $0x8] sm:$0xff] 0.0
          %194 = vst [vmem:[#allocation2 + $0x10] sm:$0xff] 0.0
          %195 = vst [vmem:[#allocation2 + $0x18] sm:$0xff] 0.0
          %196 = vst [vmem:[#allocation3] sm:$0xff] -inf
          %197 = vst [vmem:[#allocation3 + $0x8] sm:$0xff] -inf
          %198 = vst [vmem:[#allocation3 + $0x10] sm:$0xff] -inf
          %199 = vst [vmem:[#allocation3 + $0x18] sm:$0xff] -inf
        $region32: #{tpu_custom_call.1} parent=23 // pred_fallthru
          _
        %v200 = vld [vmem:[%s163] sm:$0xff]
        %v201 = vld [vmem:[%s163 + $0x10] sm:$0xff]
        %v202 = vld [vmem:[%s163 + $0x20] sm:$0xff]
        %v203 = vld [vmem:[%s163 + $0x30] sm:$0xff]
        %v204 = vadd.f32 %v200, 0.0
        %v205 = vadd.f32 %v201, 0.0
        %v206 = vadd.f32 %v202, 0.0
        %v207 = vadd.f32 %v203, 0.0
        %s208 = scalar_lea.vmem %s163, 8 [#allocation4]
        %v209 = vld [vmem:[%s208] sm:$0xff]
        %v210 = vld [vmem:[%s208 + $0x10] sm:$0xff]
        %v211 = vld [vmem:[%s208 + $0x20] sm:$0xff]
        %v212 = vld [vmem:[%s208 + $0x30] sm:$0xff]
        %v213 = vadd.f32 %v204, %v209
        %v214 = vadd.f32 %v205, %v210
        %v215 = vadd.f32 %v206, %v211
        %v216 = vadd.f32 %v207, %v212
        %v217 = vmax.f32 %v200, %v209
        %v218 = vmax.f32 %v201, %v210
        %v219 = vmax.f32 %v202, %v211
        %v220 = vmax.f32 %v203, %v212
        %v221 = vld [vmem:[#allocation2] sm:$0xff]
        %v222 = vld [vmem:[#allocation2 + $0x8] sm:$0xff]
        %v223 = vld [vmem:[#allocation2 + $0x10] sm:$0xff]
        %v224 = vld [vmem:[#allocation2 + $0x18] sm:$0xff]
        %v225 = vadd.f32 %v221, %v213
        %v226 = vadd.f32 %v222, %v214
        %v227 = vadd.f32 %v223, %v215
        %v228 = vadd.f32 %v224, %v216
        %229 = vst [vmem:[#allocation2] sm:$0xff] %v225
        %230 = vst [vmem:[#allocation2 + $0x8] sm:$0xff] %v226
        %231 = vst [vmem:[#allocation2 + $0x10] sm:$0xff] %v227
        %232 = vst [vmem:[#allocation2 + $0x18] sm:$0xff] %v228
        %v233 = vld [vmem:[#allocation3] sm:$0xff]
        %v234 = vld [vmem:[#allocation3 + $0x8] sm:$0xff]
        %v235 = vld [vmem:[#allocation3 + $0x10] sm:$0xff]
        %v236 = vld [vmem:[#allocation3 + $0x18] sm:$0xff]
        %v237 = vmax.f32 %v233, %v217
        %v238 = vmax.f32 %v234, %v218
        %v239 = vmax.f32 %v235, %v219
        %v240 = vmax.f32 %v236, %v220
        %241 = vst [vmem:[#allocation3] sm:$0xff] %v237
        %242 = vst [vmem:[#allocation3 + $0x8] sm:$0xff] %v238
        %243 = vst [vmem:[#allocation3 + $0x10] sm:$0xff] %v239
        %244 = vst [vmem:[#allocation3 + $0x18] sm:$0xff] %v240
        // Predicated region
        $region33: #{tpu_custom_call.1} parent=23 // pred_check
          %p245 = pneg %p188
        $region34: #{tpu_custom_call.1} parent=23 // pred_check_branch
          %247 = sbr.rel (%p245) target = $region36
        $region35: #{tpu_custom_call.1} parent=23 // pred_region
          %v248 = vld [vmem:[#allocation2] sm:$0xff]
          %v249 = vld [vmem:[#allocation2 + $0x8] sm:$0xff]
          %v250 = vld [vmem:[#allocation2 + $0x10] sm:$0xff]
          %v251 = vld [vmem:[#allocation2 + $0x18] sm:$0xff]
          %252 = vadd.xlane.f32.xlu0 %v248
          %v253 = vpop.xlane.xlu0 %252
          %254 = vadd.xlane.f32.xlu0 %v249
          %v255 = vpop.xlane.xlu0 %254
          %256 = vadd.xlane.f32.xlu0 %v250
          %v257 = vpop.xlane.xlu0 %256
          %258 = vadd.xlane.f32.xlu0 %v251
          %v259 = vpop.xlane.xlu0 %258
          %v260 = vmul.f32 %v253, 0.00390625
          %v261 = vmul.f32 %v255, 0.00390625
          %v262 = vmul.f32 %v257, 0.00390625
          %v263 = vmul.f32 %v259, 0.00390625
          %v264 = vld [vmem:[#allocation3] sm:$0xff]
          %v265 = vld [vmem:[#allocation3 + $0x8] sm:$0xff]
          %v266 = vld [vmem:[#allocation3 + $0x10] sm:$0xff]
          %v267 = vld [vmem:[#allocation3 + $0x18] sm:$0xff]
          %268 = vmax.xlane.f32.xlu0 %v264
          %v269 = vpop.xlane.xlu0 %268
          %270 = vmax.xlane.f32.xlu0 %v265
          %v271 = vpop.xlane.xlu0 %270
          %272 = vmax.xlane.f32.xlu0 %v266
          %v273 = vpop.xlane.xlu0 %272
          %274 = vmax.xlane.f32.xlu0 %v267
          %v275 = vpop.xlane.xlu0 %274
          %v280 = vlaneseq
          %v281 = vand.u32 %v280, 127
          %v282 = vlaneseq
          %v283 = vshrl.u32 %v282, 7
          %v284 = vsub.s32 %v281, %v283
          %v285 = vrot.slane %v260, %v284
          %v286 = vadd.s32 %v281, 4294967288
          %v287 = vlaneseq
          %v288 = vshrl.u32 %v287, 7
          %v289 = vsub.s32 %v286, %v288
          %v290 = vrot.slane %v261, %v289
          %vm291 = vcmask 130112
          %v292 = vsel %vm291, %v290, %v285
          %v293 = vadd.s32 %v281, 4294967280
          %v294 = vlaneseq
          %v295 = vshrl.u32 %v294, 7
          %v296 = vsub.s32 %v293, %v295
          %v297 = vrot.slane %v262, %v296
          %vm298 = vcmask 195712
          %v299 = vsel %vm298, %v297, %v292
          %v300 = vadd.s32 %v281, 4294967272
          %v301 = vlaneseq
          %v302 = vshrl.u32 %v301, 7
          %v303 = vsub.s32 %v300, %v302
          %v304 = vrot.slane %v263, %v303
          %vm305 = vcmask 261312
          %v306 = vsel %vm305, %v304, %v299
          %vm308 = vcmask 253952
          %309 = vst.msk [vmem:[%s180] sm:$0x1] %vm308, %v306
          %v314 = vlaneseq
          %v315 = vshrl.u32 %v314, 7
          %v316 = vsub.s32 %v281, %v315
          %v317 = vrot.slane %v269, %v316
          %v318 = vlaneseq
          %v319 = vshrl.u32 %v318, 7
          %v320 = vsub.s32 %v286, %v319
          %v321 = vrot.slane %v271, %v320
          %v322 = vsel %vm291, %v321, %v317
          %v323 = vlaneseq
          %v324 = vshrl.u32 %v323, 7
          %v325 = vsub.s32 %v293, %v324
          %v326 = vrot.slane %v273, %v325
          %v327 = vsel %vm298, %v326, %v322
          %v328 = vlaneseq
          %v329 = vshrl.u32 %v328, 7
          %v330 = vsub.s32 %v300, %v329
          %v331 = vrot.slane %v275, %v330
          %v332 = vsel %vm305, %v331, %v327
          %334 = vst.msk [vmem:[%s186] sm:$0x1] %vm308, %v332
        $region36: #{tpu_custom_call.1} parent=23 // pred_fallthru
          _
        %s335 = sand.u32 %s71, 1
        %s336 = scalar_lea.sflag [#allocation6], %s335
        %s337 = sand.u32 %s71, 1
        %s338 = scalar_lea.vmem [#allocation7], %s337
        %s339 = sand.u32 %s97, 1
        %s340 = scalar_lea.sflag [#allocation9], %s339
        %s341 = sand.u32 %s97, 1
        %s342 = scalar_lea.vmem [#allocation8], %s341
        // Predicated region
        $region37: #{tpu_custom_call.1} parent=23 // pred_check
          %p343 = pneg %p81
        $region38: #{tpu_custom_call.1} parent=23 // pred_check_branch
          %345 = sbr.rel (%p343) target = $region40
        $region39: #{tpu_custom_call.1} parent=23 // pred_region
          %s347 = ssub.s32 16, 16
          %348 = vsyncadd %s336, %s347
          %s349 = smul.addr %s27, 16
          %s350 = scalar_lea.hbm %s1, %s349
          %s352 = sshll.u32 %s338, 4
          %s353 = int_to_ptr.vmem [resolvable:$true] %s352
          %355 = dma.vmem_to_hbm [thread:$0]  %s353, 16, %s350, %s336
        $region40: #{tpu_custom_call.1} parent=23 // pred_fallthru
          _
        // Predicated region
        $region41: #{tpu_custom_call.1} parent=23 // pred_check
          %p356 = pneg %p107
        $region42: #{tpu_custom_call.1} parent=23 // pred_check_branch
          %358 = sbr.rel (%p356) target = $region44
        $region43: #{tpu_custom_call.1} parent=23 // pred_region
          %s360 = ssub.s32 16, 16
          %361 = vsyncadd %s340, %s360
          %s362 = smul.addr %s27, 16
          %s363 = scalar_lea.hbm %s2, %s362
          %s365 = sshll.u32 %s342, 4
          %s366 = int_to_ptr.vmem [resolvable:$true] %s365
          %368 = dma.vmem_to_hbm [thread:$0]  %s366, 16, %s363, %s340
        $region44: #{tpu_custom_call.1} parent=23 // pred_fallthru
          _
      $region24: #{tpu_custom_call.1} parent=5 // pred_fallthru
        _
      %p369 = scmp.le.s32.totalorder 2, %s18
      // Predicated region
      $region45: #{tpu_custom_call.1} parent=5 // pred_check
        %p370 = pneg %p369
      $region46: #{tpu_custom_call.1} parent=5 // pred_check_branch
        %372 = sbr.rel (%p370) target = $region48
      $region47: #{tpu_custom_call.1} parent=5 // pred_region
        %s373 = ssub.s32 %s18, 2
        // Predicated region
        $region49: #{tpu_custom_call.1} parent=47 // pred_check
          %p374 = pneg %p87
        $region50: #{tpu_custom_call.1} parent=47 // pred_check_branch
          %376 = sbr.rel (%p374) target = $region52
        $region51: #{tpu_custom_call.1} parent=47 // pred_region
          %s377 = sand.u32 %s72, 1
          %s378 = scalar_lea.sflag [#allocation6], %s377
          %s379 = sand.u32 %s72, 1
          %s380 = scalar_lea.vmem [#allocation7], %s379
          %381 = dma.done %s378, 16
        $region52: #{tpu_custom_call.1} parent=47 // pred_fallthru
          _
        // Predicated region
        $region53: #{tpu_custom_call.1} parent=47 // pred_check
          %p382 = pneg %p113
        $region54: #{tpu_custom_call.1} parent=47 // pred_check_branch
          %384 = sbr.rel (%p382) target = $region56
        $region55: #{tpu_custom_call.1} parent=47 // pred_region
          %s385 = sand.u32 %s98, 1
          %s386 = scalar_lea.sflag [#allocation9], %s385
          %s387 = sand.u32 %s98, 1
          %s388 = scalar_lea.vmem [#allocation8], %s387
          %389 = dma.done %s386, 16
        $region56: #{tpu_custom_call.1} parent=47 // pred_fallthru
          _
      $region48: #{tpu_custom_call.1} parent=5 // pred_fallthru
        _
    $region6: #{tpu_custom_call.1} parent=1 // loop_footer
      %s22 = sadd.s32 1, %s18
    $region7: #{tpu_custom_call.1} parent=1 // loop_footer_branch
      %17 = sbr.rel target = $region3
    $region8: #{tpu_custom_call.1} parent=1 // loop_exit
      _
    %390 = vsyncpa [#allocation5], 1
    %s391 = scalar_lea.sflag [#allocation5], 1
    %392 = vsyncpa %s391, 1
    %393 = vsyncpa [#allocation6], 1
    %s394 = scalar_lea.sflag [#allocation6], 1
    %395 = vsyncpa %s394, 1
    %396 = vsyncpa [#allocation9], 1
    %s397 = scalar_lea.sflag [#allocation9], 1
    %398 = vsyncpa %s397, 1

</llo_original>
